<compile_context>
chip_gen: v7x
topology: tpu7x:2x2x1
jax: 0.10.0
libtpu: 0.0.40
codegen_flags: <defaults>
</compile_context>

<pallas_src>
import jax
import jax.numpy as jnp
from jax.experimental import pallas as pl
from jax.experimental.pallas import tpu as pltpu


def attention_kernel(x_ref, w_ref, b_ref, o_ref):
    """One grid step: TB batch rows.

    x_ref: (TB, S, H) slab of lstm_out (native dtype, VMEM)
    w_ref: (1, H)     Linear weight (VMEM, shared across steps)
    b_ref: (1, 1)     Linear bias (SMEM scalar, f32)
    o_ref: (TB, H)    context output rows
    """
    x = x_ref[...]                                       # (TB, S, H)
    tb, s, h = x.shape
    w = w_ref[...].reshape(1, 1, h).astype(x.dtype)      # (1, 1, H)
    b = b_ref[0, 0]                                      # f32 scalar from SMEM

    # Score projection: VPU multiply + lane reduce over H, f32 accumulation.
    # Result is (TB, S) lane-major (S on lanes) — exactly the layout the
    # softmax and the context contraction want, no squeeze/relayout.
    # (The bias is constant over the sequence so it cannot change the softmax,
    #  but it is applied for fidelity to nn.Linear.)
    scores = jnp.sum(x * w, axis=-1, dtype=jnp.float32) + b          # (TB, S)

    # Softmax over the sequence axis (dim=1 of the PyTorch module), exact.
    m = jnp.max(scores, axis=-1, keepdims=True)                      # (TB, 1)
    e = jnp.exp(scores - m)                                          # (TB, S)
    denom = jnp.sum(e, axis=-1, keepdims=True)                       # (TB, 1)
    attn = e / denom                                                 # (TB, S) f32

    # Weighted context: VPU multiply (x promoted to f32) + sublane reduce
    # over S. attn stays in f32; (TB, H) result is lane-dense for the store.
    ctx = jnp.sum(attn[:, :, None] * x, axis=1)                      # (TB, H) f32

    o_ref[...] = ctx.astype(o_ref.dtype)


def _vmem_config():
    """(per-step slab byte target, double-buffered input budget, vmem limit)."""
    MiB = 1024 * 1024
    try:
        kind = jax.devices()[0].device_kind.lower()
    except Exception:
        kind = ""
    if "v5 lite" in kind or "v5e" in kind or "v5lite" in kind:
        # ~820 GB/s HBM: 2-4 MiB/step already amortizes the ~0.35us overhead.
        return 4 * MiB, 24 * MiB, 64 * MiB
    if "v6" in kind:
        # ~1.4 TB/s HBM, 128 MiB physical VMEM: use bigger slabs.
        return 8 * MiB, 40 * MiB, 96 * MiB
    if "v7" in kind or "7x" in kind:
        # ~3.2 TB/s HBM but only 64 MiB physical VMEM: big slabs, tight budget.
        return 12 * MiB, 32 * MiB, 48 * MiB
    # Unknown backend / interpret mode: conservative values valid everywhere.
    return 8 * MiB, 32 * MiB, 48 * MiB


def _choose_block_b(batch, seq, hidden, itemsize, slab_target, input_budget):
    """Pick the per-step batch tile TB (multiple of 8)."""
    bytes_per_row = seq * hidden * itemsize
    if 2 * 8 * bytes_per_row > input_budget:
        # TODO(synk): dispatch to an S-chunked online-softmax variant here.
        raise NotImplementedError(
            "lstm_out rows too large for a single-slab kernel; an S-chunked "
            "online-softmax variant is required for this (S, H).")

    padded_b = -(-batch // 8) * 8
    tb = 8
    # Grow TB until the per-step slab reaches the HBM-amortization target,
    # while the double-buffered input slab stays inside the VMEM budget.
    while (tb < padded_b
           and tb * bytes_per_row < slab_target
           and 2 * (2 * tb) * bytes_per_row <= input_budget):
        tb *= 2
    tb = min(tb, padded_b)

    # Keep at least two grid blocks when the batch allows it, so the
    # "parallel" batch axis can shard across both TensorCores on v7x.
    half_rows = -(-batch // 2)                       # ceil(B / 2)
    two_block_cap = max(8, -(-half_rows // 8) * 8)   # 8-aligned
    tb = min(tb, two_block_cap)
    return tb


def attention_forward(lstm_out, weight, bias):
    """lstm_out: (B, S, H); weight: (1, H); bias: (1,)  ->  context: (B, H)."""
    B, S, H = lstm_out.shape
    dtype = lstm_out.dtype
    itemsize = jnp.dtype(dtype).itemsize

    slab_target, input_budget, vmem_limit = _vmem_config()
    tb = _choose_block_b(B, S, H, itemsize, slab_target, input_budget)

    num_blocks = -(-B // tb)
    b_pad = num_blocks * tb
    if b_pad != B:
        # Zero-padded rows are harmless (uniform softmax, zero context) and
        # are sliced away below.
        lstm_out = jnp.concatenate(
            [lstm_out, jnp.zeros((b_pad - B, S, H), dtype)], axis=0)

    weight2d = weight.reshape(1, H)
    bias_smem = bias.reshape(1, 1).astype(jnp.float32)

    cost = pl.CostEstimate(
        flops=4 * b_pad * S * H,                 # score mul+add, context mul+add
        transcendentals=b_pad * S,               # exp
        bytes_accessed=(b_pad * S * H + b_pad * H + H) * itemsize,
    )

    out = pl.pallas_call(
        attention_kernel,
        out_shape=jax.ShapeDtypeStruct((b_pad, H), dtype),
        grid_spec=pltpu.PrefetchScalarGridSpec(
            num_scalar_prefetch=0,
            grid=(num_blocks,),
            in_specs=[
                pl.BlockSpec((tb, S, H), lambda i: (i, 0, 0)),      # lstm_out slab
                pl.BlockSpec((1, H), lambda i: (0, 0)),             # weight (shared)
                pl.BlockSpec(memory_space=pltpu.MemorySpace.SMEM),  # bias scalar
            ],
            out_specs=pl.BlockSpec((tb, H), lambda i: (i, 0)),
        ),
        compiler_params=pltpu.CompilerParams(
            dimension_semantics=("parallel",),
            vmem_limit_bytes=vmem_limit,
        ),
        cost_estimate=cost,
    )(lstm_out, weight2d, bias_smem)

    return out[:B]


def attention_reference(lstm_out, weight, bias):
    # Pure-JAX reference matching the PyTorch forward exactly.
    scores = jnp.einsum("bsh,h->bs", lstm_out, weight[0]) + bias[0]   # (B, S)
    attn = jax.nn.softmax(scores, axis=1)[..., None]                  # (B, S, 1)
    return jnp.sum(attn * lstm_out, axis=1)                           # (B, H)


if __name__ == "__main__":
    B, S, H = 2, 8, 32

    key = jax.random.PRNGKey(0)
    k_x, k_w, k_b = jax.random.split(key, 3)

    # Input (what the LSTM would have produced): (B, S, H)
    lstm_out = jax.random.normal(k_x, (B, S, H), dtype=jnp.float32)

    # nn.Linear(hidden_size, 1) parameters, deterministic uniform init
    # matching PyTorch's default bound 1/sqrt(H).
    bound = 1.0 / jnp.sqrt(jnp.float32(H))
    weight = jax.random.uniform(k_w, (1, H), minval=-bound, maxval=bound,
                                dtype=jnp.float32)
    bias = jax.random.uniform(k_b, (1,), minval=-bound, maxval=bound,
                              dtype=jnp.float32)

    out = attention_forward(lstm_out, weight, bias)
    out = jax.block_until_ready(out)

    ref = attention_reference(lstm_out, weight, bias)
    assert out.shape == (B, H)
    # Exact-reciprocal softmax + f32 attention weights: only accumulation-order
    # rounding remains, well inside 1e-4.
    max_err = jnp.max(jnp.abs(out - ref))
    assert jnp.allclose(out, ref, atol=1e-4, rtol=1e-4), (
        f"max abs err = {max_err}")

    print("KERNEL_OK")
</pallas_src>

<mosaic_0001>
module attributes {stable_mosaic.version = 11 : i64} {
  func.func @attention_kernel(%arg0: i32, %arg1: memref<8x8x32xf32, #tpu.memory_space<vmem>>, %arg2: memref<1x32xf32, #tpu.memory_space<vmem>>, %arg3: memref<1x1xf32, #tpu.memory_space<smem>>, %arg4: memref<8x32xf32, #tpu.memory_space<vmem>>) attributes {dimension_semantics = [#tpu.dimension_semantics<parallel>], iteration_bounds = array<i64: 1>, scalar_prefetch = 0 : i64, scratch_operands = 0 : i64, tpu.core_type = #tpu.core_type<tc>, window_params = [{transform_indices = @transform_0, window_bounds = array<i64: 8, 8, 32>}, {pipeline_mode = #tpu.pipeline_mode<synchronous>, transform_indices = @transform_1, window_bounds = array<i64: 1, 32>}, {transform_indices = @transform_2, window_bounds = array<i64: 1, 1>}, {transform_indices = @transform_3, window_bounds = array<i64: 8, 32>}]} {
    %c0 = arith.constant 0 : index
    %c0_0 = arith.constant 0 : index
    %c0_1 = arith.constant 0 : index
    %0 = vector.load %arg1[%c0, %c0_0, %c0_1] : memref<8x8x32xf32, #tpu.memory_space<vmem>>, vector<8x8x32xf32>
    %c0_2 = arith.constant 0 : index
    %c0_3 = arith.constant 0 : index
    %1 = vector.load %arg2[%c0_2, %c0_3] : memref<1x32xf32, #tpu.memory_space<vmem>>, vector<1x32xf32>
    %2 = vector.shape_cast %1 : vector<1x32xf32> to vector<1x1x32xf32>
    %c0_4 = arith.constant 0 : index
    %c0_5 = arith.constant 0 : index
    %3 = memref.load %arg3[%c0_4, %c0_5] : memref<1x1xf32, #tpu.memory_space<smem>>
    %4 = vector.broadcast %2 : vector<1x1x32xf32> to vector<8x8x32xf32>
    %5 = arith.mulf %0, %4 : vector<8x8x32xf32>
    %cst = arith.constant dense<0.000000e+00> : vector<8x8xf32>
    %6 = vector.multi_reduction <add>, %5, %cst [2] : vector<8x8x32xf32> to vector<8x8xf32>
    %7 = vector.broadcast %3 : f32 to vector<8x8xf32>
    %8 = arith.addf %6, %7 : vector<8x8xf32>
    %cst_6 = arith.constant dense<0xFF800000> : vector<8xf32>
    %9 = vector.multi_reduction <maximumf>, %8, %cst_6 [1] : vector<8x8xf32> to vector<8xf32>
    %10 = vector.shape_cast %9 : vector<8xf32> to vector<8x1xf32>
    %11 = vector.broadcast %10 : vector<8x1xf32> to vector<8x8xf32>
    %12 = arith.subf %8, %11 : vector<8x8xf32>
    %13 = math.exp %12 : vector<8x8xf32>
    %cst_7 = arith.constant dense<0.000000e+00> : vector<8xf32>
    %14 = vector.multi_reduction <add>, %13, %cst_7 [1] : vector<8x8xf32> to vector<8xf32>
    %15 = vector.shape_cast %14 : vector<8xf32> to vector<8x1xf32>
    %16 = vector.broadcast %15 : vector<8x1xf32> to vector<8x8xf32>
    %17 = arith.divf %13, %16 : vector<8x8xf32>
    %18 = vector.shape_cast %17 : vector<8x8xf32> to vector<8x8x1xf32>
    %19 = vector.broadcast %18 : vector<8x8x1xf32> to vector<8x8x32xf32>
    %20 = arith.mulf %19, %0 : vector<8x8x32xf32>
    %cst_8 = arith.constant dense<0.000000e+00> : vector<8x32xf32>
    %21 = vector.multi_reduction <add>, %20, %cst_8 [1] : vector<8x8x32xf32> to vector<8x32xf32>
    %c0_9 = arith.constant 0 : index
    %c0_10 = arith.constant 0 : index
    %22 = vector.load %arg4[%c0_9, %c0_10] : memref<8x32xf32, #tpu.memory_space<vmem>>, vector<8x32xf32>
    tpu.vector_store %arg4[%c0_9, %c0_10], %21 {strides = array<i32>} : memref<8x32xf32, #tpu.memory_space<vmem>>, vector<8x32xf32>,
    return
  }
  func.func @transform_0(%arg0: i32) -> (i32, i32, i32) {
    %c0_i32 = arith.constant 0 : i32
    %c0_i32_0 = arith.constant 0 : i32
    %c0_i32_1 = arith.constant 0 : i32
    return %arg0, %c0_i32, %c0_i32_0 : i32, i32, i32
  }
  func.func @transform_1(%arg0: i32) -> (i32, i32) {
    %c0_i32 = arith.constant 0 : i32
    %c0_i32_0 = arith.constant 0 : i32
    %c0_i32_1 = arith.constant 0 : i32
    return %c0_i32, %c0_i32_0 : i32, i32
  }
  func.func @transform_2(%arg0: i32) -> (i32, i32) {
    %c0_i32 = arith.constant 0 : i32
    %c0_i32_0 = arith.constant 0 : i32
    %c0_i32_1 = arith.constant 0 : i32
    return %c0_i32, %c0_i32_0 : i32, i32
  }
  func.func @transform_3(%arg0: i32) -> (i32, i32) {
    %c0_i32 = arith.constant 0 : i32
    %c0_i32_0 = arith.constant 0 : i32
    return %arg0, %c0_i32 : i32, i32
  }
}

</mosaic_0001>

<llo_original>
// kernel: tpu_custom_call.1
$region0: #{tpu_custom_call.1}
  #allocation0 [shape = 'u32[]', space=smem, size = 0x4, offset = 0x4, fixed_abs, tag = 'smem constant byte address 0x4 - core index']
  #allocation1 [shape = 'u32[144,128]{1,0:T(1,128)}', space=vmem, size = 0x12000, scoped, tag = 'internal scratch']
  #allocation2 [shape = 'f32[1,1]{1,0:T(1,128)S(6)}', space=smem, size = 0x200, scoped, tag = 'scoped memory for tpu_custom_call.1']
  %s0 = inlined_call_operand.hbm [shape: f32[8,8,32], index: 0, kind: input, shape index: {}]
  %s1 = inlined_call_operand.vmem [shape: f32[1,32], index: 1, kind: input, shape index: {}]
  %s2 = inlined_call_operand.<no memory space> [shape: f32[1,1], index: 2, kind: input, shape index: {}]
  %s3 = inlined_call_operand.hbm [shape: f32[8,32], index: 3, kind: output, shape index: {}]
  %s4 = sld [smem:[#allocation0]]
  $region26: #{tpu_custom_call.1} parent=0
    _
  %s6 = ssub.s32 1, %s4
  %s7 = scalar_select 0, %s6, %s4
  %8 = sst [smem:[#allocation2]] %s2
  $region1: #{tpu_custom_call.1} parent=0
    #allocation3 [shape = 'u8[32768]{0}', space=vmem, size = 0x8000, scoped, tag = 'input window, operand 0, single buffered']
    #allocation4 [shape = 's32[1]{0}', space=sflag, size = 0x4, scoped, tag = 'scoped memory for tpu_custom_call.1']
    #allocation5 [shape = 's32[1]{0}', space=sflag, size = 0x4, scoped, tag = 'scoped memory for tpu_custom_call.1']
    #allocation6 [shape = 'u8[4096]{0}', space=vmem, size = 0x1000, scoped, tag = 'output window, operand 0, single buffered']
    %9 = vsyncpa [#allocation4], 0
    %10 = vsyncpa [#allocation5], 0
    // Predicated region
    $region2: #{tpu_custom_call.1} parent=1 // pred_check
      _
    $region3: #{tpu_custom_call.1} parent=1 // pred_check_branch
      %12 = sbr.rel (0) target = $region5
    $region4: #{tpu_custom_call.1} parent=1 // pred_region
      %s14 = ssub.s32 1024, 1024
      %15 = vsyncadd [#allocation4], %s14
      %s16 = sshll.u32 [#allocation3], 4
      %s17 = int_to_ptr.vmem [resolvable:$true] %s16
      %22 = dma.hbm_to_vmem [thread:$0]  %s0, 1024, %s17, [#allocation4], 128, 128, 8
    $region5: #{tpu_custom_call.1} parent=1 // pred_fallthru
      _
    // Predicated region
    $region6: #{tpu_custom_call.1} parent=1 // pred_check
      _
    $region7: #{tpu_custom_call.1} parent=1 // pred_check_branch
      %24 = sbr.rel (0) target = $region9
    $region8: #{tpu_custom_call.1} parent=1 // pred_region
      _
    $region9: #{tpu_custom_call.1} parent=1 // pred_fallthru
      _
    // Predicated region
    $region10: #{tpu_custom_call.1} parent=1 // pred_check
      _
    $region11: #{tpu_custom_call.1} parent=1 // pred_check_branch
      %26 = sbr.rel (0) target = $region13
    $region12: #{tpu_custom_call.1} parent=1 // pred_region
      _
    $region13: #{tpu_custom_call.1} parent=1 // pred_fallthru
      _
    // Predicated region
    $region14: #{tpu_custom_call.1} parent=1 // pred_check
      _
    $region15: #{tpu_custom_call.1} parent=1 // pred_check_branch
      %28 = sbr.rel (0) target = $region17
    $region16: #{tpu_custom_call.1} parent=1 // pred_region
      %29 = dma.done [#allocation4], 1024
    $region17: #{tpu_custom_call.1} parent=1 // pred_fallthru
      _
    %v30 = vld [vmem:[#allocation3] sm:$0xff]
    %v31 = vld [vmem:[#allocation3 + $0x8] sm:$0xff]
    %v32 = vld [vmem:[#allocation3 + $0x10] sm:$0xff]
    %v33 = vld [vmem:[#allocation3 + $0x18] sm:$0xff]
    %v34 = vld [vmem:[#allocation3 + $0x20] sm:$0xff]
    %v35 = vld [vmem:[#allocation3 + $0x28] sm:$0xff]
    %v36 = vld [vmem:[#allocation3 + $0x30] sm:$0xff]
    %v37 = vld [vmem:[#allocation3 + $0x38] sm:$0xff]
    %v38 = vld [vmem:[%s1] sm:$0x1]
    %s39 = sld [smem:[#allocation2]]
    %v41 = vlaneseq
    %v42 = vshrl.u32 %v41, 7
    %v43 = vsub.s32 0, %v42
    %v44 = vrot.slane %v38, %v43
    %v46 = vmul.f32 %v30, %v44
    %v47 = vmul.f32 %v31, %v44
    %v48 = vmul.f32 %v32, %v44
    %v49 = vmul.f32 %v33, %v44
    %v50 = vmul.f32 %v34, %v44
    %v51 = vmul.f32 %v35, %v44
    %v52 = vmul.f32 %v36, %v44
    %v53 = vmul.f32 %v37, %v44
    %vm54 = vcmask 261120
    %v55 = vsel %vm54, %v46, 0.0
    %56 = vadd.xlane.f32.xlu0 %v55
    %v57 = vpop.xlane.xlu0 %56
    %v58 = vsel %vm54, %v47, 0.0
    %59 = vadd.xlane.f32.xlu0 %v58
    %v60 = vpop.xlane.xlu0 %59
    %v61 = vsel %vm54, %v48, 0.0
    %62 = vadd.xlane.f32.xlu0 %v61
    %v63 = vpop.xlane.xlu0 %62
    %v64 = vsel %vm54, %v49, 0.0
    %65 = vadd.xlane.f32.xlu0 %v64
    %v66 = vpop.xlane.xlu0 %65
    %v67 = vsel %vm54, %v50, 0.0
    %68 = vadd.xlane.f32.xlu0 %v67
    %v69 = vpop.xlane.xlu0 %68
    %v70 = vsel %vm54, %v51, 0.0
    %71 = vadd.xlane.f32.xlu0 %v70
    %v72 = vpop.xlane.xlu0 %71
    %v73 = vsel %vm54, %v52, 0.0
    %74 = vadd.xlane.f32.xlu0 %v73
    %v75 = vpop.xlane.xlu0 %74
    %v76 = vsel %vm54, %v53, 0.0
    %77 = vadd.xlane.f32.xlu0 %v76
    %v78 = vpop.xlane.xlu0 %77
    %v79 = vstv %s39
    %v80 = vadd.f32 %v57, %v79
    %v81 = vadd.f32 %v60, %v79
    %v82 = vadd.f32 %v63, %v79
    %v83 = vadd.f32 %v66, %v79
    %v84 = vadd.f32 %v69, %v79
    %v85 = vadd.f32 %v72, %v79
    %v86 = vadd.f32 %v75, %v79
    %v87 = vadd.f32 %v78, %v79
    %v96 = vlaneseq
    %v97 = vand.u32 %v96, 127
    %v98 = vlaneseq
    %v99 = vshrl.u32 %v98, 7
    %v100 = vsub.s32 %v97, %v99
    %v101 = vrot.slane %v80, %v100
    %v102 = vlaneseq
    %v103 = vshrl.u32 %v102, 7
    %v104 = vsub.s32 %v97, %v103
    %v105 = vrot.slane %v81, %v104
    %v106 = vlaneseq
    %v107 = vshrl.u32 %v106, 7
    %v108 = vsub.s32 %v97, %v107
    %v109 = vrot.slane %v82, %v108
    %v110 = vlaneseq
    %v111 = vshrl.u32 %v110, 7
    %v112 = vsub.s32 %v97, %v111
    %v113 = vrot.slane %v83, %v112
    %v114 = vlaneseq
    %v115 = vshrl.u32 %v114, 7
    %v116 = vsub.s32 %v97, %v115
    %v117 = vrot.slane %v84, %v116
    %v118 = vlaneseq
    %v119 = vshrl.u32 %v118, 7
    %v120 = vsub.s32 %v97, %v119
    %v121 = vrot.slane %v85, %v120
    %v122 = vlaneseq
    %v123 = vshrl.u32 %v122, 7
    %v124 = vsub.s32 %v97, %v123
    %v125 = vrot.slane %v86, %v124
    %v126 = vlaneseq
    %v127 = vshrl.u32 %v126, 7
    %v128 = vsub.s32 %v97, %v127
    %v129 = vrot.slane %v87, %v128
    %vm130 = vcmask 1041409
    %v131 = vsel %vm130, %v105, %v101
    %vm132 = vcmask 1042434
    %v133 = vsel %vm132, %v109, %v131
    %vm134 = vcmask 1043459
    %v135 = vsel %vm134, %v113, %v133
    %vm136 = vcmask 1044484
    %v137 = vsel %vm136, %v117, %v135
    %vm138 = vcmask 1045509
    %v139 = vsel %vm138, %v121, %v137
    %vm140 = vcmask 1046534
    %v141 = vsel %vm140, %v125, %v139
    %vm142 = vcmask 1047559
    %v143 = vsel %vm142, %v129, %v141
    %vm145 = vcmask 64512
    %v146 = vsel %vm145, %v143, -inf
    %147 = vmax.xlane.f32.xlu0 %v146
    %v148 = vpop.xlane.xlu0 %147
    %v150 = vlaneseq
    %v151 = vshrl.u32 %v150, 7
    %v152 = vsub.s32 0, %v151
    %v153 = vrot.slane %v148, %v152
    %v154 = vlaneseq
    %v155 = vshrl.u32 %v154, 7
    %v156 = vsub.s32 1, %v155
    %v157 = vrot.slane %v148, %v156
    %v158 = vlaneseq
    %v159 = vshrl.u32 %v158, 7
    %v160 = vsub.s32 2, %v159
    %v161 = vrot.slane %v148, %v160
    %v162 = vlaneseq
    %v163 = vshrl.u32 %v162, 7
    %v164 = vsub.s32 3, %v163
    %v165 = vrot.slane %v148, %v164
    %v166 = vlaneseq
    %v167 = vshrl.u32 %v166, 7
    %v168 = vsub.s32 4, %v167
    %v169 = vrot.slane %v148, %v168
    %v170 = vlaneseq
    %v171 = vshrl.u32 %v170, 7
    %v172 = vsub.s32 5, %v171
    %v173 = vrot.slane %v148, %v172
    %v174 = vlaneseq
    %v175 = vshrl.u32 %v174, 7
    %v176 = vsub.s32 6, %v175
    %v177 = vrot.slane %v148, %v176
    %v178 = vlaneseq
    %v179 = vshrl.u32 %v178, 7
    %v180 = vsub.s32 7, %v179
    %v181 = vrot.slane %v148, %v180
    %v190 = vsub.f32 %v80, %v153
    %v191 = vsub.f32 %v81, %v157
    %v192 = vsub.f32 %v82, %v161
    %v193 = vsub.f32 %v83, %v165
    %v194 = vsub.f32 %v84, %v169
    %v195 = vsub.f32 %v85, %v173
    %v196 = vsub.f32 %v86, %v177
    %v197 = vsub.f32 %v87, %v181
    %v198 = vmul.f32 %v190, 1.442695
    %v199 = vpow.pop %v198
    %v200 = vmul.f32 %v191, 1.442695
    %v201 = vpow.pop %v200
    %v202 = vmul.f32 %v192, 1.442695
    %v203 = vpow.pop %v202
    %v204 = vmul.f32 %v193, 1.442695
    %v205 = vpow.pop %v204
    %v206 = vmul.f32 %v194, 1.442695
    %v207 = vpow.pop %v206
    %v208 = vmul.f32 %v195, 1.442695
    %v209 = vpow.pop %v208
    %v210 = vmul.f32 %v196, 1.442695
    %v211 = vpow.pop %v210
    %v212 = vmul.f32 %v197, 1.442695
    %v213 = vpow.pop %v212
    %222 = vset.pattern.permute.xlu0 0
    %223 = vperm.xlu0 %222, %v199
    %v224 = vpop.permute.xlu0 %223
    %225 = vset.pattern.permute.xlu0 0
    %226 = vperm.xlu0 %225, %v201
    %v227 = vpop.permute.xlu0 %226
    %228 = vset.pattern.permute.xlu0 0
    %229 = vperm.xlu0 %228, %v203
    %v230 = vpop.permute.xlu0 %229
    %231 = vset.pattern.permute.xlu0 0
    %232 = vperm.xlu0 %231, %v205
    %v233 = vpop.permute.xlu0 %232
    %234 = vset.pattern.permute.xlu0 0
    %235 = vperm.xlu0 %234, %v207
    %v236 = vpop.permute.xlu0 %235
    %237 = vset.pattern.permute.xlu0 0
    %238 = vperm.xlu0 %237, %v209
    %v239 = vpop.permute.xlu0 %238
    %240 = vset.pattern.permute.xlu0 0
    %241 = vperm.xlu0 %240, %v211
    %v242 = vpop.permute.xlu0 %241
    %243 = vset.pattern.permute.xlu0 0
    %244 = vperm.xlu0 %243, %v213
    %v245 = vpop.permute.xlu0 %244
    %v246 = vlaneseq
    %v247 = vshrl.u32 %v246, 7
    %v248 = vsub.s32 %v97, %v247
    %v249 = vrot.slane %v224, %v248
    %v250 = vlaneseq
    %v251 = vshrl.u32 %v250, 7
    %v252 = vsub.s32 %v97, %v251
    %v253 = vrot.slane %v227, %v252
    %v254 = vlaneseq
    %v255 = vshrl.u32 %v254, 7
    %v256 = vsub.s32 %v97, %v255
    %v257 = vrot.slane %v230, %v256
    %v258 = vlaneseq
    %v259 = vshrl.u32 %v258, 7
    %v260 = vsub.s32 %v97, %v259
    %v261 = vrot.slane %v233, %v260
    %v262 = vlaneseq
    %v263 = vshrl.u32 %v262, 7
    %v264 = vsub.s32 %v97, %v263
    %v265 = vrot.slane %v236, %v264
    %v266 = vlaneseq
    %v267 = vshrl.u32 %v266, 7
    %v268 = vsub.s32 %v97, %v267
    %v269 = vrot.slane %v239, %v268
    %v270 = vlaneseq
    %v271 = vshrl.u32 %v270, 7
    %v272 = vsub.s32 %v97, %v271
    %v273 = vrot.slane %v242, %v272
    %v274 = vlaneseq
    %v275 = vshrl.u32 %v274, 7
    %v276 = vsub.s32 %v97, %v275
    %v277 = vrot.slane %v245, %v276
    %v278 = vsel %vm130, %v253, %v249
    %v279 = vsel %vm132, %v257, %v278
    %v280 = vsel %vm134, %v261, %v279
    %v281 = vsel %vm136, %v265, %v280
    %v282 = vsel %vm138, %v269, %v281
    %v283 = vsel %vm140, %v273, %v282
    %v284 = vsel %vm142, %v277, %v283
    %v286 = vsel %vm145, %v284, 0.0
    %287 = vadd.xlane.f32.xlu0 %v286
    %v288 = vpop.xlane.xlu0 %287
    %v290 = vlaneseq
    %v291 = vshrl.u32 %v290, 7
    %v292 = vsub.s32 0, %v291
    %v293 = vrot.slane %v288, %v292
    %v294 = vlaneseq
    %v295 = vshrl.u32 %v294, 7
    %v296 = vsub.s32 1, %v295
    %v297 = vrot.slane %v288, %v296
    %v298 = vlaneseq
    %v299 = vshrl.u32 %v298, 7
    %v300 = vsub.s32 2, %v299
    %v301 = vrot.slane %v288, %v300
    %v302 = vlaneseq
    %v303 = vshrl.u32 %v302, 7
    %v304 = vsub.s32 3, %v303
    %v305 = vrot.slane %v288, %v304
    %v306 = vlaneseq
    %v307 = vshrl.u32 %v306, 7
    %v308 = vsub.s32 4, %v307
    %v309 = vrot.slane %v288, %v308
    %v310 = vlaneseq
    %v311 = vshrl.u32 %v310, 7
    %v312 = vsub.s32 5, %v311
    %v313 = vrot.slane %v288, %v312
    %v314 = vlaneseq
    %v315 = vshrl.u32 %v314, 7
    %v316 = vsub.s32 6, %v315
    %v317 = vrot.slane %v288, %v316
    %v318 = vlaneseq
    %v319 = vshrl.u32 %v318, 7
    %v320 = vsub.s32 7, %v319
    %v321 = vrot.slane %v288, %v320
    %v330 = vrcp.pop %v293
    %v331 = vmul.f32 %v199, %v330
    %v332 = vrcp.pop %v297
    %v333 = vmul.f32 %v201, %v332
    %v334 = vrcp.pop %v301
    %v335 = vmul.f32 %v203, %v334
    %v336 = vrcp.pop %v305
    %v337 = vmul.f32 %v205, %v336
    %v338 = vrcp.pop %v309
    %v339 = vmul.f32 %v207, %v338
    %v340 = vrcp.pop %v313
    %v341 = vmul.f32 %v209, %v340
    %v342 = vrcp.pop %v317
    %v343 = vmul.f32 %v211, %v342
    %v344 = vrcp.pop %v321
    %v345 = vmul.f32 %v213, %v344
    %347 = vset.pattern.permute.xlu0 0
    %348 = vperm.xlu0 %347, %v331
    %v349 = vpop.permute.xlu0 %348
    %352 = vset.pattern.permute.xlu0 0
    %353 = vperm.xlu0 %352, %v333
    %v354 = vpop.permute.xlu0 %353
    %357 = vset.pattern.permute.xlu0 0
    %358 = vperm.xlu0 %357, %v335
    %v359 = vpop.permute.xlu0 %358
    %362 = vset.pattern.permute.xlu0 0
    %363 = vperm.xlu0 %362, %v337
    %v364 = vpop.permute.xlu0 %363
    %367 = vset.pattern.permute.xlu0 0
    %368 = vperm.xlu0 %367, %v339
    %v369 = vpop.permute.xlu0 %368
    %372 = vset.pattern.permute.xlu0 0
    %373 = vperm.xlu0 %372, %v341
    %v374 = vpop.permute.xlu0 %373
    %377 = vset.pattern.permute.xlu0 0
    %378 = vperm.xlu0 %377, %v343
    %v379 = vpop.permute.xlu0 %378
    %382 = vset.pattern.permute.xlu0 0
    %383 = vperm.xlu0 %382, %v345
    %v384 = vpop.permute.xlu0 %383
    %v386 = vmul.f32 %v349, %v30
    %v387 = vmul.f32 %v354, %v31
    %v388 = vmul.f32 %v359, %v32
    %v389 = vmul.f32 %v364, %v33
    %v390 = vmul.f32 %v369, %v34
    %v391 = vmul.f32 %v374, %v35
    %v392 = vmul.f32 %v379, %v36
    %v393 = vmul.f32 %v384, %v37
    %v394 = vsel %vm54, %v386, 0.0
    %v395 = vrot.slane %v394, 4
    %v396 = vadd.f32 %v394, %v395
    %v397 = vrot.slane %v396, 2
    %v398 = vadd.f32 %v396, %v397
    %v399 = vrot.slane %v398, 1
    %v400 = vadd.f32 %v398, %v399
    %v401 = vsel %vm54, %v387, 0.0
    %v402 = vrot.slane %v401, 4
    %v403 = vadd.f32 %v401, %v402
    %v404 = vrot.slane %v403, 2
    %v405 = vadd.f32 %v403, %v404
    %v406 = vrot.slane %v405, 1
    %v407 = vadd.f32 %v405, %v406
    %v408 = vsel %vm54, %v388, 0.0
    %v409 = vrot.slane %v408, 4
    %v410 = vadd.f32 %v408, %v409
    %v411 = vrot.slane %v410, 2
    %v412 = vadd.f32 %v410, %v411
    %v413 = vrot.slane %v412, 1
    %v414 = vadd.f32 %v412, %v413
    %v415 = vsel %vm54, %v389, 0.0
    %v416 = vrot.slane %v415, 4
    %v417 = vadd.f32 %v415, %v416
    %v418 = vrot.slane %v417, 2
    %v419 = vadd.f32 %v417, %v418
    %v420 = vrot.slane %v419, 1
    %v421 = vadd.f32 %v419, %v420
    %v422 = vsel %vm54, %v390, 0.0
    %v423 = vrot.slane %v422, 4
    %v424 = vadd.f32 %v422, %v423
    %v425 = vrot.slane %v424, 2
    %v426 = vadd.f32 %v424, %v425
    %v427 = vrot.slane %v426, 1
    %v428 = vadd.f32 %v426, %v427
    %v429 = vsel %vm54, %v391, 0.0
    %v430 = vrot.slane %v429, 4
    %v431 = vadd.f32 %v429, %v430
    %v432 = vrot.slane %v431, 2
    %v433 = vadd.f32 %v431, %v432
    %v434 = vrot.slane %v433, 1
    %v435 = vadd.f32 %v433, %v434
    %v436 = vsel %vm54, %v392, 0.0
    %v437 = vrot.slane %v436, 4
    %v438 = vadd.f32 %v436, %v437
    %v439 = vrot.slane %v438, 2
    %v440 = vadd.f32 %v438, %v439
    %v441 = vrot.slane %v440, 1
    %v442 = vadd.f32 %v440, %v441
    %v443 = vsel %vm54, %v393, 0.0
    %v444 = vrot.slane %v443, 4
    %v445 = vadd.f32 %v443, %v444
    %v446 = vrot.slane %v445, 2
    %v447 = vadd.f32 %v445, %v446
    %v448 = vrot.slane %v447, 1
    %v449 = vadd.f32 %v447, %v448
    %v458 = vsel %vm130, %v407, %v400
    %v459 = vsel %vm132, %v414, %v458
    %v460 = vsel %vm134, %v421, %v459
    %v461 = vsel %vm136, %v428, %v460
    %v462 = vsel %vm138, %v435, %v461
    %v463 = vsel %vm140, %v442, %v462
    %v464 = vsel %vm142, %v449, %v463
    %466 = vst.msk [vmem:[#allocation6] sm:$0xff] %vm54, %v464
    // Predicated region
    $region18: #{tpu_custom_call.1} parent=1 // pred_check
      _
    $region19: #{tpu_custom_call.1} parent=1 // pred_check_branch
      %468 = sbr.rel (0) target = $region21
    $region20: #{tpu_custom_call.1} parent=1 // pred_region
      %s470 = ssub.s32 128, 128
      %471 = vsyncadd [#allocation5], %s470
      %s473 = sshll.u32 [#allocation6], 4
      %s474 = int_to_ptr.vmem [resolvable:$true] %s473
      %476 = dma.vmem_to_hbm [thread:$0]  %s474, 128, %s3, [#allocation5]
    $region21: #{tpu_custom_call.1} parent=1 // pred_fallthru
      _
    // Predicated region
    $region22: #{tpu_custom_call.1} parent=1 // pred_check
      _
    $region23: #{tpu_custom_call.1} parent=1 // pred_check_branch
      %478 = sbr.rel (0) target = $region25
    $region24: #{tpu_custom_call.1} parent=1 // pred_region
      %479 = dma.done [#allocation5], 128
    $region25: #{tpu_custom_call.1} parent=1 // pred_fallthru
      _
    %480 = vsyncpa [#allocation4], 1
    %481 = vsyncpa [#allocation5], 1

</llo_original>
